<compile_context>
chip_gen: v5e
topology: v5e:2x2
jax: 0.10.0
libtpu: 0.0.40
codegen_flags: <defaults>
</compile_context>

<pallas_src>
import functools

import jax
import jax.numpy as jnp
from jax.experimental import pallas as pl
from jax.experimental.pallas import tpu as pltpu

HIDDEN = 128


def qnetwork_kernel(x_ref, w1_ref, b1_ref, w2_ref, b2_ref, w3_ref, b3_ref, o_ref):
    # Layer 1: Linear(input_dim -> 128) + ReLU   (bf16 operands, f32 accumulate)
    h1 = jnp.dot(x_ref[...], w1_ref[...], preferred_element_type=jnp.float32)
    h1 = jnp.maximum(h1 + b1_ref[...], 0.0)
    # Layer 2: Linear(128 -> 128) + ReLU
    h2 = jnp.dot(h1.astype(w2_ref.dtype), w2_ref[...],
                 preferred_element_type=jnp.float32)
    h2 = jnp.maximum(h2 + b2_ref[...], 0.0)
    # Layer 3: Linear(128 -> output_dim), no activation
    out = jnp.dot(h2.astype(w3_ref.dtype), w3_ref[...],
                  preferred_element_type=jnp.float32)
    o_ref[...] = (out + b3_ref[...]).astype(o_ref.dtype)


def _round_up(n, m):
    return ((n + m - 1) // m) * m


@functools.partial(jax.jit, static_argnames=("tile_b",))
def qnetwork_forward(x, params, *, tile_b=512):
    """Fused QNetwork forward. x: (B, input_dim) float32 -> (B, output_dim) f32."""
    w1, b1, w2, b2, w3, b3 = params
    B, in_dim = x.shape
    out_dim = w3.shape[1]

    # Batch tile: big enough to amortize the ~0.35us/step overhead, small
    # enough (<=512) that the (TILE_B, 128) f32 intermediates don't spill.
    tb = min(tile_b, _round_up(B, 8))
    Bp = _round_up(B, tb)
    if Bp != B:
        x = jnp.pad(x, ((0, Bp - B), (0, 0)))

    # bf16 on the MXU, f32 accumulation; biases / output remain f32.
    x_bf = x.astype(jnp.bfloat16)
    w1_bf = w1.astype(jnp.bfloat16)
    w2_bf = w2.astype(jnp.bfloat16)
    w3_bf = w3.astype(jnp.bfloat16)

    grid = (Bp // tb,)

    # Weights/biases: constant index_map -> one DMA, resident across all steps.
    def resident(a):
        return pl.BlockSpec(a.shape, lambda i: (0,) * a.ndim)

    flops = 2 * Bp * (in_dim * HIDDEN + HIDDEN * HIDDEN + HIDDEN * out_dim)
    bytes_accessed = (
        2 * (x_bf.size + w1_bf.size + w2_bf.size + w3_bf.size)
        + 4 * (b1.size + b2.size + b3.size)
        + 4 * Bp * out_dim
    )

    out = pl.pallas_call(
        qnetwork_kernel,
        out_shape=jax.ShapeDtypeStruct((Bp, out_dim), jnp.float32),
        grid=grid,
        in_specs=[
            pl.BlockSpec((tb, in_dim), lambda i: (i, 0)),   # x: tiled over batch
            resident(w1_bf), resident(b1),
            resident(w2_bf), resident(b2),
            resident(w3_bf), resident(b3),
        ],
        out_specs=pl.BlockSpec((tb, out_dim), lambda i: (i, 0)),
        compiler_params=pltpu.CompilerParams(
            # Batch steps are independent -> shard across v7x's 2 TensorCores.
            dimension_semantics=("parallel",),
        ),
        cost_estimate=pl.CostEstimate(
            flops=flops, transcendentals=0, bytes_accessed=bytes_accessed),
    )(x_bf, w1_bf, b1, w2_bf, b2, w3_bf, b3)

    return out[:B] if Bp != B else out


def init_qnetwork_params(key, input_dim, output_dim, hidden=HIDDEN):
    """PyTorch nn.Linear default init: U(-1/sqrt(fan_in), 1/sqrt(fan_in)).
    Weights stored as (in, out); biases as (1, out)."""
    def linear(k, fan_in, fan_out):
        kw, kb = jax.random.split(k)
        bound = 1.0 / jnp.sqrt(jnp.float32(fan_in))
        w = jax.random.uniform(kw, (fan_in, fan_out), jnp.float32, -bound, bound)
        b = jax.random.uniform(kb, (1, fan_out), jnp.float32, -bound, bound)
        return w, b

    k1, k2, k3 = jax.random.split(key, 3)
    w1, b1 = linear(k1, input_dim, hidden)
    w2, b2 = linear(k2, hidden, hidden)
    w3, b3 = linear(k3, hidden, output_dim)
    return (w1, b1, w2, b2, w3, b3)


def qnetwork_reference(x, params):
    """Pure-JAX f32 reference (matches the PyTorch forward)."""
    w1, b1, w2, b2, w3, b3 = params
    h1 = jnp.maximum(x @ w1 + b1, 0.0)
    h2 = jnp.maximum(h1 @ w2 + b2, 0.0)
    return h2 @ w3 + b3


if __name__ == "__main__":
    key = jax.random.PRNGKey(0)
    k_params, k_x1, k_x2 = jax.random.split(key, 3)

    input_dim, output_dim = 32, 8
    params = init_qnetwork_params(k_params, input_dim, output_dim)

    # Small case: batch=8 (single grid step).
    x_small = jax.random.normal(k_x1, (8, input_dim), jnp.float32)
    out_small = jax.block_until_ready(qnetwork_forward(x_small, params))
    ref_small = qnetwork_reference(x_small, params)
    assert out_small.shape == (8, output_dim)
    assert jnp.allclose(out_small, ref_small, atol=2e-2, rtol=2e-2), \
        "small-batch mismatch vs reference"

    # Larger, non-multiple batch with a small tile: exercises batch padding,
    # multi-step grid, and resident weights.
    x_big = jax.random.normal(k_x2, (300, input_dim), jnp.float32)
    out_big = jax.block_until_ready(qnetwork_forward(x_big, params, tile_b=128))
    ref_big = qnetwork_reference(x_big, params)
    assert out_big.shape == (300, output_dim)
    assert jnp.allclose(out_big, ref_big, atol=2e-2, rtol=2e-2), \
        "tiled-batch mismatch vs reference"

    print("KERNEL_OK")
</pallas_src>

<mosaic_0001>
module attributes {stable_mosaic.version = 11 : i64} {
  func.func @qnetwork_kernel(%arg0: i32, %arg1: memref<8x32xbf16, #tpu.memory_space<vmem>>, %arg2: memref<32x128xbf16, #tpu.memory_space<vmem>>, %arg3: memref<1x128xf32, #tpu.memory_space<vmem>>, %arg4: memref<128x128xbf16, #tpu.memory_space<vmem>>, %arg5: memref<1x128xf32, #tpu.memory_space<vmem>>, %arg6: memref<128x8xbf16, #tpu.memory_space<vmem>>, %arg7: memref<1x8xf32, #tpu.memory_space<vmem>>, %arg8: memref<8x8xf32, #tpu.memory_space<vmem>>) attributes {dimension_semantics = [#tpu.dimension_semantics<parallel>], iteration_bounds = array<i64: 1>, scalar_prefetch = 0 : i64, scratch_operands = 0 : i64, tpu.core_type = #tpu.core_type<tc>, window_params = [{transform_indices = @transform_0, window_bounds = array<i64: 8, 32>}, {pipeline_mode = #tpu.pipeline_mode<synchronous>, transform_indices = @transform_1, window_bounds = array<i64: 32, 128>}, {pipeline_mode = #tpu.pipeline_mode<synchronous>, transform_indices = @transform_2, window_bounds = array<i64: 1, 128>}, {pipeline_mode = #tpu.pipeline_mode<synchronous>, transform_indices = @transform_3, window_bounds = array<i64: 128, 128>}, {pipeline_mode = #tpu.pipeline_mode<synchronous>, transform_indices = @transform_4, window_bounds = array<i64: 1, 128>}, {pipeline_mode = #tpu.pipeline_mode<synchronous>, transform_indices = @transform_5, window_bounds = array<i64: 128, 8>}, {pipeline_mode = #tpu.pipeline_mode<synchronous>, transform_indices = @transform_6, window_bounds = array<i64: 1, 8>}, {transform_indices = @transform_7, window_bounds = array<i64: 8, 8>}]} {
    %c0 = arith.constant 0 : index
    %c0_0 = arith.constant 0 : index
    %0 = vector.load %arg1[%c0, %c0_0] : memref<8x32xbf16, #tpu.memory_space<vmem>>, vector<8x32xbf16>
    %c0_1 = arith.constant 0 : index
    %c0_2 = arith.constant 0 : index
    %1 = vector.load %arg2[%c0_1, %c0_2] : memref<32x128xbf16, #tpu.memory_space<vmem>>, vector<32x128xbf16>
    %cst = arith.constant dense<0.000000e+00> : vector<8x128xf32>
    %2 = tpu.matmul %0, %1, %cst {dimension_numbers = #tpu.dot_dimension_numbers<[1], [0], [0], [1], [0, 0, 1, 1], [], []>} : vector<8x32xbf16>, vector<32x128xbf16>, vector<8x128xf32> -> vector<8x128xf32>
    %c0_3 = arith.constant 0 : index
    %c0_4 = arith.constant 0 : index
    %3 = vector.load %arg3[%c0_3, %c0_4] : memref<1x128xf32, #tpu.memory_space<vmem>>, vector<1x128xf32>
    %4 = vector.broadcast %3 : vector<1x128xf32> to vector<8x128xf32>
    %5 = arith.addf %2, %4 : vector<8x128xf32>
    %cst_5 = arith.constant 0.000000e+00 : f32
    %6 = vector.broadcast %cst_5 : f32 to vector<8x128xf32>
    %7 = arith.maximumf %5, %6 : vector<8x128xf32>
    %8 = arith.truncf %7 : vector<8x128xf32> to vector<8x128xbf16>
    %c0_6 = arith.constant 0 : index
    %c0_7 = arith.constant 0 : index
    %9 = vector.load %arg4[%c0_6, %c0_7] : memref<128x128xbf16, #tpu.memory_space<vmem>>, vector<128x128xbf16>
    %cst_8 = arith.constant dense<0.000000e+00> : vector<8x128xf32>
    %10 = tpu.matmul %8, %9, %cst_8 {dimension_numbers = #tpu.dot_dimension_numbers<[1], [0], [0], [1], [0, 0, 1, 1], [], []>} : vector<8x128xbf16>, vector<128x128xbf16>, vector<8x128xf32> -> vector<8x128xf32>
    %c0_9 = arith.constant 0 : index
    %c0_10 = arith.constant 0 : index
    %11 = vector.load %arg5[%c0_9, %c0_10] : memref<1x128xf32, #tpu.memory_space<vmem>>, vector<1x128xf32>
    %12 = vector.broadcast %11 : vector<1x128xf32> to vector<8x128xf32>
    %13 = arith.addf %10, %12 : vector<8x128xf32>
    %cst_11 = arith.constant 0.000000e+00 : f32
    %14 = vector.broadcast %cst_11 : f32 to vector<8x128xf32>
    %15 = arith.maximumf %13, %14 : vector<8x128xf32>
    %16 = arith.truncf %15 : vector<8x128xf32> to vector<8x128xbf16>
    %c0_12 = arith.constant 0 : index
    %c0_13 = arith.constant 0 : index
    %17 = vector.load %arg6[%c0_12, %c0_13] : memref<128x8xbf16, #tpu.memory_space<vmem>>, vector<128x8xbf16>
    %cst_14 = arith.constant dense<0.000000e+00> : vector<8x8xf32>
    %18 = tpu.matmul %16, %17, %cst_14 {dimension_numbers = #tpu.dot_dimension_numbers<[1], [0], [0], [1], [0, 0, 1, 1], [], []>} : vector<8x128xbf16>, vector<128x8xbf16>, vector<8x8xf32> -> vector<8x8xf32>
    %c0_15 = arith.constant 0 : index
    %c0_16 = arith.constant 0 : index
    %19 = vector.load %arg7[%c0_15, %c0_16] : memref<1x8xf32, #tpu.memory_space<vmem>>, vector<1x8xf32>
    %20 = vector.broadcast %19 : vector<1x8xf32> to vector<8x8xf32>
    %21 = arith.addf %18, %20 : vector<8x8xf32>
    %c0_17 = arith.constant 0 : index
    %c0_18 = arith.constant 0 : index
    %22 = vector.load %arg8[%c0_17, %c0_18] : memref<8x8xf32, #tpu.memory_space<vmem>>, vector<8x8xf32>
    tpu.vector_store %arg8[%c0_17, %c0_18], %21 {strides = array<i32>} : memref<8x8xf32, #tpu.memory_space<vmem>>, vector<8x8xf32>,
    return
  }
  func.func @transform_0(%arg0: i32) -> (i32, i32) {
    %c0_i32 = arith.constant 0 : i32
    %c0_i32_0 = arith.constant 0 : i32
    return %arg0, %c0_i32 : i32, i32
  }
  func.func @transform_1(%arg0: i32) -> (i32, i32) {
    %c0_i32 = arith.constant 0 : i32
    %c0_i32_0 = arith.constant 0 : i32
    %c0_i32_1 = arith.constant 0 : i32
    return %c0_i32, %c0_i32_0 : i32, i32
  }
  func.func @transform_2(%arg0: i32) -> (i32, i32) {
    %c0_i32 = arith.constant 0 : i32
    %c0_i32_0 = arith.constant 0 : i32
    %c0_i32_1 = arith.constant 0 : i32
    return %c0_i32, %c0_i32_0 : i32, i32
  }
  func.func @transform_3(%arg0: i32) -> (i32, i32) {
    %c0_i32 = arith.constant 0 : i32
    %c0_i32_0 = arith.constant 0 : i32
    %c0_i32_1 = arith.constant 0 : i32
    return %c0_i32, %c0_i32_0 : i32, i32
  }
  func.func @transform_4(%arg0: i32) -> (i32, i32) {
    %c0_i32 = arith.constant 0 : i32
    %c0_i32_0 = arith.constant 0 : i32
    %c0_i32_1 = arith.constant 0 : i32
    return %c0_i32, %c0_i32_0 : i32, i32
  }
  func.func @transform_5(%arg0: i32) -> (i32, i32) {
    %c0_i32 = arith.constant 0 : i32
    %c0_i32_0 = arith.constant 0 : i32
    %c0_i32_1 = arith.constant 0 : i32
    return %c0_i32, %c0_i32_0 : i32, i32
  }
  func.func @transform_6(%arg0: i32) -> (i32, i32) {
    %c0_i32 = arith.constant 0 : i32
    %c0_i32_0 = arith.constant 0 : i32
    %c0_i32_1 = arith.constant 0 : i32
    return %c0_i32, %c0_i32_0 : i32, i32
  }
  func.func @transform_7(%arg0: i32) -> (i32, i32) {
    %c0_i32 = arith.constant 0 : i32
    %c0_i32_0 = arith.constant 0 : i32
    return %arg0, %c0_i32 : i32, i32
  }
}

</mosaic_0001>

<llo_original>
// kernel: qnetwork_forward.1
$region0: #{qnetwork_forward.1}
  #allocation0 [shape = 'u32[]', space=smem, size = 0x4, offset = 0x4, fixed_abs, tag = 'smem constant byte address 0x4 - core index']
  #allocation1 [shape = 'u32[72,128]{1,0:T(1,128)}', space=vmem, size = 0x9000, scoped, tag = 'internal scratch']
  %s0 = inlined_call_operand.vmem [shape: bf16[8,32], index: 0, kind: input, shape index: {}]
  %s1 = inlined_call_operand.vmem [shape: bf16[32,128], index: 1, kind: input, shape index: {}]
  %s2 = inlined_call_operand.vmem [shape: f32[1,128], index: 2, kind: input, shape index: {}]
  %s3 = inlined_call_operand.vmem [shape: bf16[128,128], index: 3, kind: input, shape index: {}]
  %s4 = inlined_call_operand.vmem [shape: f32[1,128], index: 4, kind: input, shape index: {}]
  %s5 = inlined_call_operand.vmem [shape: bf16[128,8], index: 5, kind: input, shape index: {}]
  %s6 = inlined_call_operand.vmem [shape: f32[1,8], index: 6, kind: input, shape index: {}]
  %s7 = inlined_call_operand.hbm [shape: f32[8,8], index: 7, kind: output, shape index: {}]
  %s8 = sld [smem:[#allocation0]]
  $region38: #{qnetwork_forward.1} parent=0
    _
  %s10 = ssub.s32 1, %s8
  %s11 = scalar_select 0, %s10, %s8
  $region1: #{qnetwork_forward.1} parent=0
    #allocation2 [shape = 'u8[4096]{0}', space=vmem, size = 0x1000, scoped, tag = 'output window, operand 0, single buffered']
    #allocation3 [shape = 's32[1]{0}', space=sflag, size = 0x4, scoped, tag = 'scoped memory for qnetwork_forward.1']
    %12 = vsyncpa [#allocation3], 0
    // Predicated region
    $region2: #{qnetwork_forward.1} parent=1 // pred_check
      _
    $region3: #{qnetwork_forward.1} parent=1 // pred_check_branch
      %14 = sbr.rel (0) target = $region5
    $region4: #{qnetwork_forward.1} parent=1 // pred_region
      _
    $region5: #{qnetwork_forward.1} parent=1 // pred_fallthru
      _
    // Predicated region
    $region6: #{qnetwork_forward.1} parent=1 // pred_check
      _
    $region7: #{qnetwork_forward.1} parent=1 // pred_check_branch
      %16 = sbr.rel (0) target = $region9
    $region8: #{qnetwork_forward.1} parent=1 // pred_region
      _
    $region9: #{qnetwork_forward.1} parent=1 // pred_fallthru
      _
    // Predicated region
    $region10: #{qnetwork_forward.1} parent=1 // pred_check
      _
    $region11: #{qnetwork_forward.1} parent=1 // pred_check_branch
      %18 = sbr.rel (0) target = $region13
    $region12: #{qnetwork_forward.1} parent=1 // pred_region
      _
    $region13: #{qnetwork_forward.1} parent=1 // pred_fallthru
      _
    // Predicated region
    $region14: #{qnetwork_forward.1} parent=1 // pred_check
      _
    $region15: #{qnetwork_forward.1} parent=1 // pred_check_branch
      %20 = sbr.rel (0) target = $region17
    $region16: #{qnetwork_forward.1} parent=1 // pred_region
      _
    $region17: #{qnetwork_forward.1} parent=1 // pred_fallthru
      _
    // Predicated region
    $region18: #{qnetwork_forward.1} parent=1 // pred_check
      _
    $region19: #{qnetwork_forward.1} parent=1 // pred_check_branch
      %22 = sbr.rel (0) target = $region21
    $region20: #{qnetwork_forward.1} parent=1 // pred_region
      _
    $region21: #{qnetwork_forward.1} parent=1 // pred_fallthru
      _
    // Predicated region
    $region22: #{qnetwork_forward.1} parent=1 // pred_check
      _
    $region23: #{qnetwork_forward.1} parent=1 // pred_check_branch
      %24 = sbr.rel (0) target = $region25
    $region24: #{qnetwork_forward.1} parent=1 // pred_region
      _
    $region25: #{qnetwork_forward.1} parent=1 // pred_fallthru
      _
    // Predicated region
    $region26: #{qnetwork_forward.1} parent=1 // pred_check
      _
    $region27: #{qnetwork_forward.1} parent=1 // pred_check_branch
      %26 = sbr.rel (0) target = $region29
    $region28: #{qnetwork_forward.1} parent=1 // pred_region
      _
    $region29: #{qnetwork_forward.1} parent=1 // pred_fallthru
      _
    %v28 = vld [vmem:[%s0] sm:$0xf]
    %v29 = vld [vmem:[%s1] sm:$0xf]
    %v30 = vld [vmem:[%s1 + $0x4] sm:$0xf]
    %v31 = vld [vmem:[%s1 + $0x8] sm:$0xf]
    %v32 = vld [vmem:[%s1 + $0xc] sm:$0xf]
    %v33 = vld [vmem:[%s2] sm:$0x1]
    %v35 = vperm.slane %v33, 0
    %v41 = vunpack.c.l.b16 %v29
    %v42 = vunpack.c.l.b16 %v30
    %v43 = vunpack.c.l.b16 %v31
    %v44 = vunpack.c.l.b16 %v32
    %v45 = vpack.c.b16 %v42, %v41
    %v46 = vpack.c.b16 %v44, %v43
    %vm49 = vcmask 261120
    %v51 = vsel %vm49, %v28, 0
    %53 = vmatpush.bf16.msra.mxu0 0
    %54 = vmatpush.bf16.msra.mxu0 0
    %55 = vmatpush.bf16.msra.mxu0 0
    %56 = vmatpush.bf16.msra.mxu0 0
    %57 = vmatpush.bf16.msra.mxu0 0
    %58 = vmatpush.bf16.msra.mxu0 0
    %59 = vmatpush.bf16.msra.mxu0 %v46
    %60 = vmatpush.bf16.msra.mxu0 %v45
    %61 = vmatmul.bf16.gmra.mxu0 %v51
    %v62 = vpop.f32.mrf.mxu0
    %v63 = vadd.f32 %v35, %v62
    %v64 = vpop.f32.mrf.mxu0
    %65 = vdwg.mxu0
    %v66 = vmax.f32 %v63, 0.0
    %v67 = vpack.c.bf16 %v66, %v66
    %v68 = vld [vmem:[%s3] sm:$0xf]
    %v69 = vld [vmem:[%s3 + $0x4] sm:$0xf]
    %v70 = vld [vmem:[%s3 + $0x8] sm:$0xf]
    %v71 = vld [vmem:[%s3 + $0xc] sm:$0xf]
    %v72 = vld [vmem:[%s3 + $0x10] sm:$0xf]
    %v73 = vld [vmem:[%s3 + $0x14] sm:$0xf]
    %v74 = vld [vmem:[%s3 + $0x18] sm:$0xf]
    %v75 = vld [vmem:[%s3 + $0x1c] sm:$0xf]
    %v76 = vld [vmem:[%s3 + $0x20] sm:$0xf]
    %v77 = vld [vmem:[%s3 + $0x24] sm:$0xf]
    %v78 = vld [vmem:[%s3 + $0x28] sm:$0xf]
    %v79 = vld [vmem:[%s3 + $0x2c] sm:$0xf]
    %v80 = vld [vmem:[%s3 + $0x30] sm:$0xf]
    %v81 = vld [vmem:[%s3 + $0x34] sm:$0xf]
    %v82 = vld [vmem:[%s3 + $0x38] sm:$0xf]
    %v83 = vld [vmem:[%s3 + $0x3c] sm:$0xf]
    %v84 = vld [vmem:[%s4] sm:$0x1]
    %v86 = vperm.slane %v84, 0
    %v104 = vunpack.c.l.b16 %v68
    %v105 = vunpack.c.l.b16 %v69
    %v106 = vunpack.c.l.b16 %v70
    %v107 = vunpack.c.l.b16 %v71
    %v108 = vunpack.c.l.b16 %v72
    %v109 = vunpack.c.l.b16 %v73
    %v110 = vunpack.c.l.b16 %v74
    %v111 = vunpack.c.l.b16 %v75
    %v112 = vunpack.c.l.b16 %v76
    %v113 = vunpack.c.l.b16 %v77
    %v114 = vunpack.c.l.b16 %v78
    %v115 = vunpack.c.l.b16 %v79
    %v116 = vunpack.c.l.b16 %v80
    %v117 = vunpack.c.l.b16 %v81
    %v118 = vunpack.c.l.b16 %v82
    %v119 = vunpack.c.l.b16 %v83
    %v120 = vpack.c.b16 %v105, %v104
    %v121 = vpack.c.b16 %v107, %v106
    %v122 = vpack.c.b16 %v109, %v108
    %v123 = vpack.c.b16 %v111, %v110
    %v124 = vpack.c.b16 %v113, %v112
    %v125 = vpack.c.b16 %v115, %v114
    %v126 = vpack.c.b16 %v117, %v116
    %v127 = vpack.c.b16 %v119, %v118
    %136 = vmatpush.bf16.msra.mxu0 %v127
    %137 = vmatpush.bf16.msra.mxu0 %v126
    %138 = vmatpush.bf16.msra.mxu0 %v125
    %139 = vmatpush.bf16.msra.mxu0 %v124
    %140 = vmatpush.bf16.msra.mxu0 %v123
    %141 = vmatpush.bf16.msra.mxu0 %v122
    %142 = vmatpush.bf16.msra.mxu0 %v121
    %143 = vmatpush.bf16.msra.mxu0 %v120
    %144 = vmatmul.bf16.gmra.mxu0 %v67
    %v145 = vpop.f32.mrf.mxu0
    %v146 = vadd.f32 %v86, %v145
    %v147 = vpop.f32.mrf.mxu0
    %148 = vdwg.mxu0
    %v149 = vmax.f32 %v146, 0.0
    %v150 = vpack.c.bf16 %v149, %v149
    %v151 = vld [vmem:[%s5] sm:$0xf]
    %v152 = vld [vmem:[%s5 + $0x4] sm:$0xf]
    %v153 = vld [vmem:[%s5 + $0x8] sm:$0xf]
    %v154 = vld [vmem:[%s5 + $0xc] sm:$0xf]
    %v155 = vld [vmem:[%s5 + $0x10] sm:$0xf]
    %v156 = vld [vmem:[%s5 + $0x14] sm:$0xf]
    %v157 = vld [vmem:[%s5 + $0x18] sm:$0xf]
    %v158 = vld [vmem:[%s5 + $0x1c] sm:$0xf]
    %v159 = vld [vmem:[%s5 + $0x20] sm:$0xf]
    %v160 = vld [vmem:[%s5 + $0x24] sm:$0xf]
    %v161 = vld [vmem:[%s5 + $0x28] sm:$0xf]
    %v162 = vld [vmem:[%s5 + $0x2c] sm:$0xf]
    %v163 = vld [vmem:[%s5 + $0x30] sm:$0xf]
    %v164 = vld [vmem:[%s5 + $0x34] sm:$0xf]
    %v165 = vld [vmem:[%s5 + $0x38] sm:$0xf]
    %v166 = vld [vmem:[%s5 + $0x3c] sm:$0xf]
    %v167 = vld [vmem:[%s6] sm:$0x1]
    %v169 = vperm.slane %v167, 0
    %v187 = vunpack.c.l.b16 %v151
    %v188 = vunpack.c.l.b16 %v152
    %v189 = vunpack.c.l.b16 %v153
    %v190 = vunpack.c.l.b16 %v154
    %v191 = vunpack.c.l.b16 %v155
    %v192 = vunpack.c.l.b16 %v156
    %v193 = vunpack.c.l.b16 %v157
    %v194 = vunpack.c.l.b16 %v158
    %v195 = vunpack.c.l.b16 %v159
    %v196 = vunpack.c.l.b16 %v160
    %v197 = vunpack.c.l.b16 %v161
    %v198 = vunpack.c.l.b16 %v162
    %v199 = vunpack.c.l.b16 %v163
    %v200 = vunpack.c.l.b16 %v164
    %v201 = vunpack.c.l.b16 %v165
    %v202 = vunpack.c.l.b16 %v166
    %v203 = vpack.c.b16 %v188, %v187
    %v204 = vpack.c.b16 %v190, %v189
    %v205 = vpack.c.b16 %v192, %v191
    %v206 = vpack.c.b16 %v194, %v193
    %v207 = vpack.c.b16 %v196, %v195
    %v208 = vpack.c.b16 %v198, %v197
    %v209 = vpack.c.b16 %v200, %v199
    %v210 = vpack.c.b16 %v202, %v201
    %219 = vmatpush.bf16.msra.mxu0 %v210
    %220 = vmatpush.bf16.msra.mxu0 %v209
    %221 = vmatpush.bf16.msra.mxu0 %v208
    %222 = vmatpush.bf16.msra.mxu0 %v207
    %223 = vmatpush.bf16.msra.mxu0 %v206
    %224 = vmatpush.bf16.msra.mxu0 %v205
    %225 = vmatpush.bf16.msra.mxu0 %v204
    %226 = vmatpush.bf16.msra.mxu0 %v203
    %227 = vmatmul.bf16.gmra.mxu0 %v150
    %v228 = vpop.f32.mrf.mxu0
    %v229 = vadd.f32 %v169, %v228
    %v230 = vpop.f32.mrf.mxu0
    %231 = vdwg.mxu0
    %vm232 = vcmask 64512
    %233 = vst.msk [vmem:[#allocation2] sm:$0xff] %vm232, %v229
    // Predicated region
    $region30: #{qnetwork_forward.1} parent=1 // pred_check
      _
    $region31: #{qnetwork_forward.1} parent=1 // pred_check_branch
      %235 = sbr.rel (0) target = $region33
    $region32: #{qnetwork_forward.1} parent=1 // pred_region
      %237 = vsyncadd [#allocation3], 0
      %s239 = sshll.u32 [#allocation2], 4
      %s240 = int_to_ptr.vmem [resolvable:$true] %s239
      %s241 = sshll.u32 %s7, 4
      %s242 = int_to_ptr.hbm [resolvable:$true] %s241
      %244 = dma.vmem_to_hbm [thread:$0]  %s240, 128, %s242, [#allocation3]
    $region33: #{qnetwork_forward.1} parent=1 // pred_fallthru
      _
    // Predicated region
    $region34: #{qnetwork_forward.1} parent=1 // pred_check
      _
    $region35: #{qnetwork_forward.1} parent=1 // pred_check_branch
      %246 = sbr.rel (0) target = $region37
    $region36: #{qnetwork_forward.1} parent=1 // pred_region
      %248 = dma.done [#allocation3], 128
    $region37: #{qnetwork_forward.1} parent=1 // pred_fallthru
      _
    %249 = vsyncpa [#allocation3], 1

</llo_original>
